<compile_context>
chip_gen: v7x
topology: tpu7x:2x2x1
jax: 0.10.0
libtpu: 0.0.40
codegen_flags: <defaults>
</compile_context>

<pallas_src>
import functools

import numpy as np
import jax
import jax.numpy as jnp
from jax.experimental import pallas as pl
from jax.experimental.pallas import tpu as pltpu


def transformer_moves_kernel(moves_ref, sel_ref, wqkv_ref, bqkv_ref, wo_ref,
                             w1_ref, b1_ref, w2_ref, vec_ref, out_ref,
                             *, f_dim, tq, n_valid, num_q_tiles):
    F = f_dim
    sel = sel_ref[...]                                    # (T, F) 0/1 selection matrix
    moves_all = moves_ref[...]                            # (B_pad, T), resident across grid

    # Feature gather fused as an exact 0/1 matmul: moves @ sel == moves[:, allowed].
    x_all = jnp.dot(moves_all, sel, preferred_element_type=jnp.float32)      # (B_pad, F)

    wqkv = wqkv_ref[...]                                  # (F, 3F) fused [Wq | Wk | Wv]^T
    bqkv = bqkv_ref[...]                                  # (1, 3F)

    if num_q_tiles == 1:
        # Single fused N=3F MXU push instead of three N=F pushes.
        x_q = x_all
        qkv = jnp.dot(x_all, wqkv, preferred_element_type=jnp.float32) + bqkv
        q = qkv[:, :F]
        k = qkv[:, F:2 * F]
        v = qkv[:, 2 * F:]
    else:
        # Query tile: slice rows of the resident moves block (no extra DMA).
        start = pl.multiple_of(pl.program_id(0) * tq, tq)
        x_q = jnp.dot(moves_ref[pl.ds(start, tq), :], sel,
                      preferred_element_type=jnp.float32)                    # (tq, F)
        # K/V for the whole (padded) sequence, fused into one N=2F matmul.
        kv = jnp.dot(x_all, wqkv[:, F:], preferred_element_type=jnp.float32) + bqkv[:, F:]
        k = kv[:, :F]
        v = kv[:, F:]
        q = jnp.dot(x_q, wqkv[:, :F], preferred_element_type=jnp.float32) + bqkv[:, :F]

    # ---- single-head self-attention (seq = batch for this module) ----
    scale = float(F) ** -0.5
    s = jnp.dot(q, k.T, preferred_element_type=jnp.float32) * scale          # (tq, B_pad)
    if moves_all.shape[0] > n_valid:                      # static check: mask padded key rows
        col = jax.lax.broadcasted_iota(jnp.int32, s.shape, 1)
        s = jnp.where(col < n_valid, s, -1e30)
    s = s - jnp.max(s, axis=-1, keepdims=True)
    p = jnp.exp(s)
    denom = jnp.sum(p, axis=-1, keepdims=True)
    r = pl.reciprocal(denom, approx=True)                 # EUP slot (shares unit with exp)
    r = r * (2.0 - denom * r)                             # one Newton step -> ~f32 accuracy
    attn = p * r
    ctx = jnp.dot(attn, v, preferred_element_type=jnp.float32)               # (tq, F)

    vecs = vec_ref[...]                                   # (8, F) packed small vectors
    bo, ln1_w, ln1_b = vecs[0:1], vecs[1:2], vecs[2:3]
    b2, ln2_w, ln2_b = vecs[3:4], vecs[4:5], vecs[5:6]
    wout, bout = vecs[6:7], vecs[7:8, 0:1]

    attn_out = jnp.dot(ctx, wo_ref[...], preferred_element_type=jnp.float32) + bo

    # ---- residual + LayerNorm 1 ----
    h = x_q + attn_out
    mu = jnp.mean(h, axis=-1, keepdims=True)
    d = h - mu
    var = jnp.mean(d * d, axis=-1, keepdims=True)
    h = d * jax.lax.rsqrt(var + 1e-5) * ln1_w + ln1_b

    # ---- feed-forward (ReLU) ----
    ff = jnp.dot(h, w1_ref[...], preferred_element_type=jnp.float32) + b1_ref[...]
    ff = jnp.maximum(ff, 0.0)
    ff = jnp.dot(ff, w2_ref[...], preferred_element_type=jnp.float32) + b2

    # ---- residual + LayerNorm 2 ----
    h2 = h + ff
    mu2 = jnp.mean(h2, axis=-1, keepdims=True)
    d2 = h2 - mu2
    var2 = jnp.mean(d2 * d2, axis=-1, keepdims=True)
    h2 = d2 * jax.lax.rsqrt(var2 + 1e-5) * ln2_w + ln2_b

    # ---- output head Linear(F, 1): VPU broadcast-mul + lane reduce, lane-dense store ----
    logit = jnp.sum(h2 * wout, axis=-1, keepdims=True) + bout                # (tq, 1)
    out_ref[...] = jnp.transpose(logit)[None]                                # (1, 1, tq)


def transformer_moves_forward(x_tuple, allowed_features, params, tq=None):
    """x_tuple = (board, sf_eval, moves); only moves is used, as in the PyTorch module."""
    _board, _sf_eval, moves = x_tuple
    moves = jnp.asarray(moves, jnp.float32)
    B, T = moves.shape
    af = np.asarray(allowed_features)
    F = int(af.shape[0])
    H = int(params["w1_t"].shape[1])

    # Static 0/1 selection matrix: moves @ sel == moves[:, allowed_features] exactly.
    sel_np = np.zeros((T, F), np.float32)
    sel_np[af, np.arange(F)] = 1.0
    sel = jnp.asarray(sel_np)

    # Query-row tiling (seq_len == batch for this module).
    if tq is None:
        tq = B if B <= 256 else 256
    nt = -(-B // tq)                                      # cdiv
    if nt > 1 and tq % 8 != 0:
        raise ValueError("query tile size must be a multiple of 8 when tiling")
    B_pad = nt * tq
    if B_pad > B:
        moves_p = jnp.concatenate([moves, jnp.zeros((B_pad - B, T), jnp.float32)], axis=0)
    else:
        moves_p = moves

    # Fused QKV weight/bias; pack the tiny per-feature vectors into one (8, F) slab.
    wqkv_t = jnp.concatenate([params["wq_t"], params["wk_t"], params["wv_t"]], axis=1)
    bqkv = jnp.concatenate([params["bq"], params["bk"], params["bv"]], axis=1)
    vecs = jnp.concatenate(
        [params["bo"], params["ln1_w"], params["ln1_b"], params["b2"],
         params["ln2_w"], params["ln2_b"], params["wout_t"].T,
         jnp.broadcast_to(params["bout"], (1, F))], axis=0)

    inputs = [moves_p, sel, wqkv_t, bqkv, params["wo_t"],
              params["w1_t"], params["b1"], params["w2_t"], vecs]

    def whole(shape):                                     # resident (same block every step)
        return pl.BlockSpec(shape, lambda i, _s=shape: (0,) * len(_s))

    in_specs = [
        pl.BlockSpec((B_pad, T), lambda i: (0, 0)),       # moves (K/V + q-tile slices)
        whole((T, F)), whole((F, 3 * F)), whole((1, 3 * F)),
        whole((F, F)), whole((F, H)), whole((1, H)), whole((H, F)), whole((8, F)),
    ]
    out_specs = pl.BlockSpec((1, 1, tq), lambda i: (i, 0, 0))

    # Explicit scoped-VMEM budget from the live buffers (defaults are far below physical).
    est = 4 * (2 * B_pad * T
               + 2 * (T * F + F * 3 * F + 3 * F + F * F + F * H + H + H * F + 8 * F)
               + B_pad * 4 * F + tq * (5 * F + H) + 3 * tq * B_pad + 2 * tq)
    vmem_limit = int(min(max(2 * est, 32 * 1024 * 1024), 64 * 1024 * 1024))

    kernel = functools.partial(transformer_moves_kernel,
                               f_dim=F, tq=tq, n_valid=B, num_q_tiles=nt)
    out = pl.pallas_call(
        kernel,
        out_shape=jax.ShapeDtypeStruct((nt, 1, tq), jnp.float32),
        grid=(nt,),
        in_specs=in_specs,
        out_specs=out_specs,
        compiler_params=pltpu.CompilerParams(
            dimension_semantics=("parallel",),            # shard q-tiles across TCs (v7x)
            vmem_limit_bytes=vmem_limit),
    )(*inputs)
    return out.reshape(-1)[:B]                            # (B,) == .squeeze(1).squeeze(1)


def _reference(x_tuple, allowed_features, p):
    """Pure-JAX reference of the eval-mode TransformerEncoderLayer + Linear head."""
    _, _, moves = x_tuple
    x = jnp.asarray(moves, jnp.float32)[:, np.asarray(allowed_features)]
    F = x.shape[-1]
    q = x @ p["wq_t"] + p["bq"]
    k = x @ p["wk_t"] + p["bk"]
    v = x @ p["wv_t"] + p["bv"]
    s = (q @ k.T) / jnp.sqrt(jnp.float32(F))
    a = jax.nn.softmax(s, axis=-1)
    ao = (a @ v) @ p["wo_t"] + p["bo"]
    h = x + ao
    h = (h - h.mean(-1, keepdims=True)) / jnp.sqrt(h.var(-1, keepdims=True) + 1e-5)
    h = h * p["ln1_w"] + p["ln1_b"]
    ff = jnp.maximum(h @ p["w1_t"] + p["b1"], 0.0) @ p["w2_t"] + p["b2"]
    h2 = h + ff
    h2 = (h2 - h2.mean(-1, keepdims=True)) / jnp.sqrt(h2.var(-1, keepdims=True) + 1e-5)
    h2 = h2 * p["ln2_w"] + p["ln2_b"]
    return (h2 @ p["wout_t"] + p["bout"])[:, 0]


if __name__ == "__main__":
    # Small shapes consistent with the module's forward:
    B = 16                                   # batch (treated as seq_len by the encoder layer)
    total_move_features = 64                 # raw width of `moves`
    allowed_features = np.arange(0, 64, 2)   # F = 32 selected features
    F = len(allowed_features)                # d_model
    H = 64                                   # hidden_units (dim_feedforward)

    key = jax.random.PRNGKey(0)
    keys = jax.random.split(key, 12)

    def init(k, shape, scale=0.1):
        return (scale * jax.random.normal(k, shape)).astype(jnp.float32)

    params = {
        # attention (weights stored transposed: y = x @ W_t + b)
        "wq_t": init(keys[0], (F, F)), "wk_t": init(keys[1], (F, F)), "wv_t": init(keys[2], (F, F)),
        "bq": init(keys[3], (1, F)), "bk": init(keys[4], (1, F)), "bv": init(keys[5], (1, F)),
        "wo_t": init(keys[6], (F, F)), "bo": init(keys[7], (1, F)),
        # layer norms (PyTorch default init: gamma=1, beta=0)
        "ln1_w": jnp.ones((1, F), jnp.float32), "ln1_b": jnp.zeros((1, F), jnp.float32),
        "ln2_w": jnp.ones((1, F), jnp.float32), "ln2_b": jnp.zeros((1, F), jnp.float32),
        # feed-forward
        "w1_t": init(keys[8], (F, H)), "b1": jnp.zeros((1, H), jnp.float32),
        "w2_t": init(keys[9], (H, F)), "b2": jnp.zeros((1, F), jnp.float32),
        # output head Linear(F, 1)
        "wout_t": init(keys[10], (F, 1)), "bout": jnp.zeros((1, 1), jnp.float32),
    }

    board = jnp.zeros((B, 8, 8), jnp.float32)   # unused by forward (matches PyTorch)
    sf_eval = jnp.zeros((B,), jnp.float32)      # unused by forward (matches PyTorch)
    moves = jax.random.normal(keys[11], (B, total_move_features)).astype(jnp.float32)
    x = (board, sf_eval, moves)

    ref = _reference(x, allowed_features, params)

    # Path 1: single query tile -> fused (F, 3F) QKV matmul, grid=(1,).
    logits = transformer_moves_forward(x, allowed_features, params)
    jax.block_until_ready(logits)
    assert logits.shape == (B,), logits.shape
    np.testing.assert_allclose(np.asarray(logits), np.asarray(ref), rtol=1e-4, atol=1e-4)

    # Path 2: tiled query rows (grid=(2,), "parallel" -> megacore-shardable on v7x).
    logits_tiled = transformer_moves_forward(x, allowed_features, params, tq=8)
    jax.block_until_ready(logits_tiled)
    np.testing.assert_allclose(np.asarray(logits_tiled), np.asarray(ref), rtol=1e-4, atol=1e-4)

    print("KERNEL_OK")
</pallas_src>

<mosaic_0001>
module attributes {stable_mosaic.version = 11 : i64} {
  func.func @transformer_moves_kernel(%arg0: i32, %arg1: memref<16x64xf32, #tpu.memory_space<vmem>>, %arg2: memref<64x32xf32, #tpu.memory_space<vmem>>, %arg3: memref<32x96xf32, #tpu.memory_space<vmem>>, %arg4: memref<1x96xf32, #tpu.memory_space<vmem>>, %arg5: memref<32x32xf32, #tpu.memory_space<vmem>>, %arg6: memref<32x64xf32, #tpu.memory_space<vmem>>, %arg7: memref<1x64xf32, #tpu.memory_space<vmem>>, %arg8: memref<64x32xf32, #tpu.memory_space<vmem>>, %arg9: memref<8x32xf32, #tpu.memory_space<vmem>>, %arg10: memref<1x1x16xf32, #tpu.memory_space<vmem>>) attributes {dimension_semantics = [#tpu.dimension_semantics<parallel>], iteration_bounds = array<i64: 1>, scalar_prefetch = 0 : i64, scratch_operands = 0 : i64, tpu.core_type = #tpu.core_type<tc>, window_params = [{pipeline_mode = #tpu.pipeline_mode<synchronous>, transform_indices = @transform_0, window_bounds = array<i64: 16, 64>}, {pipeline_mode = #tpu.pipeline_mode<synchronous>, transform_indices = @transform_1, window_bounds = array<i64: 64, 32>}, {pipeline_mode = #tpu.pipeline_mode<synchronous>, transform_indices = @transform_2, window_bounds = array<i64: 32, 96>}, {pipeline_mode = #tpu.pipeline_mode<synchronous>, transform_indices = @transform_3, window_bounds = array<i64: 1, 96>}, {pipeline_mode = #tpu.pipeline_mode<synchronous>, transform_indices = @transform_4, window_bounds = array<i64: 32, 32>}, {pipeline_mode = #tpu.pipeline_mode<synchronous>, transform_indices = @transform_5, window_bounds = array<i64: 32, 64>}, {pipeline_mode = #tpu.pipeline_mode<synchronous>, transform_indices = @transform_6, window_bounds = array<i64: 1, 64>}, {pipeline_mode = #tpu.pipeline_mode<synchronous>, transform_indices = @transform_7, window_bounds = array<i64: 64, 32>}, {pipeline_mode = #tpu.pipeline_mode<synchronous>, transform_indices = @transform_8, window_bounds = array<i64: 8, 32>}, {transform_indices = @transform_9, window_bounds = array<i64: 1, 1, 16>}]} {
    %c0 = arith.constant 0 : index
    %c0_0 = arith.constant 0 : index
    %0 = vector.load %arg2[%c0, %c0_0] : memref<64x32xf32, #tpu.memory_space<vmem>>, vector<64x32xf32>
    %c0_1 = arith.constant 0 : index
    %c0_2 = arith.constant 0 : index
    %1 = vector.load %arg1[%c0_1, %c0_2] : memref<16x64xf32, #tpu.memory_space<vmem>>, vector<16x64xf32>
    %cst = arith.constant dense<0.000000e+00> : vector<16x32xf32>
    %2 = tpu.matmul %1, %0, %cst {dimension_numbers = #tpu.dot_dimension_numbers<[1], [0], [0], [1], [0, 0, 1, 1], [], []>} : vector<16x64xf32>, vector<64x32xf32>, vector<16x32xf32> -> vector<16x32xf32>
    %c0_3 = arith.constant 0 : index
    %c0_4 = arith.constant 0 : index
    %3 = vector.load %arg3[%c0_3, %c0_4] : memref<32x96xf32, #tpu.memory_space<vmem>>, vector<32x96xf32>
    %c0_5 = arith.constant 0 : index
    %c0_6 = arith.constant 0 : index
    %4 = vector.load %arg4[%c0_5, %c0_6] : memref<1x96xf32, #tpu.memory_space<vmem>>, vector<1x96xf32>
    %cst_7 = arith.constant dense<0.000000e+00> : vector<16x96xf32>
    %5 = tpu.matmul %2, %3, %cst_7 {dimension_numbers = #tpu.dot_dimension_numbers<[1], [0], [0], [1], [0, 0, 1, 1], [], []>} : vector<16x32xf32>, vector<32x96xf32>, vector<16x96xf32> -> vector<16x96xf32>
    %6 = vector.broadcast %4 : vector<1x96xf32> to vector<16x96xf32>
    %7 = arith.addf %5, %6 : vector<16x96xf32>
    %8 = vector.extract_strided_slice %7 {offsets = [0, 0], sizes = [16, 32], strides = [1, 1]} : vector<16x96xf32> to vector<16x32xf32>
    %9 = vector.extract_strided_slice %7 {offsets = [0, 32], sizes = [16, 32], strides = [1, 1]} : vector<16x96xf32> to vector<16x32xf32>
    %10 = vector.extract_strided_slice %7 {offsets = [0, 64], sizes = [16, 32], strides = [1, 1]} : vector<16x96xf32> to vector<16x32xf32>
    %11 = tpu.transpose %9, [1, 0] : vector<16x32xf32> -> vector<32x16xf32>
    %cst_8 = arith.constant dense<0.000000e+00> : vector<16x16xf32>
    %12 = tpu.matmul %8, %11, %cst_8 {dimension_numbers = #tpu.dot_dimension_numbers<[1], [0], [0], [1], [0, 0, 1, 1], [], []>} : vector<16x32xf32>, vector<32x16xf32>, vector<16x16xf32> -> vector<16x16xf32>
    %cst_9 = arith.constant 0.176776692 : f32
    %13 = vector.broadcast %cst_9 : f32 to vector<16x16xf32>
    %14 = arith.mulf %12, %13 : vector<16x16xf32>
    %cst_10 = arith.constant dense<0xFF800000> : vector<16xf32>
    %15 = vector.multi_reduction <maximumf>, %14, %cst_10 [1] : vector<16x16xf32> to vector<16xf32>
    %16 = vector.shape_cast %15 : vector<16xf32> to vector<16x1xf32>
    %17 = vector.broadcast %16 : vector<16x1xf32> to vector<16x16xf32>
    %18 = arith.subf %14, %17 : vector<16x16xf32>
    %19 = math.exp %18 : vector<16x16xf32>
    %cst_11 = arith.constant dense<0.000000e+00> : vector<16xf32>
    %20 = vector.multi_reduction <add>, %19, %cst_11 [1] : vector<16x16xf32> to vector<16xf32>
    %21 = vector.shape_cast %20 : vector<16xf32> to vector<16x1xf32>
    %22 = tpu.reciprocal %21 {approx = true} : vector<16x1xf32> -> vector<16x1xf32>
    %23 = arith.mulf %21, %22 : vector<16x1xf32>
    %cst_12 = arith.constant 2.000000e+00 : f32
    %24 = vector.broadcast %cst_12 : f32 to vector<16x1xf32>
    %25 = arith.subf %24, %23 : vector<16x1xf32>
    %26 = arith.mulf %22, %25 : vector<16x1xf32>
    %27 = vector.broadcast %26 : vector<16x1xf32> to vector<16x16xf32>
    %28 = arith.mulf %19, %27 : vector<16x16xf32>
    %cst_13 = arith.constant dense<0.000000e+00> : vector<16x32xf32>
    %29 = tpu.matmul %28, %10, %cst_13 {dimension_numbers = #tpu.dot_dimension_numbers<[1], [0], [0], [1], [0, 0, 1, 1], [], []>} : vector<16x16xf32>, vector<16x32xf32>, vector<16x32xf32> -> vector<16x32xf32>
    %c0_14 = arith.constant 0 : index
    %c0_15 = arith.constant 0 : index
    %30 = vector.load %arg9[%c0_14, %c0_15] : memref<8x32xf32, #tpu.memory_space<vmem>>, vector<8x32xf32>
    %31 = vector.extract_strided_slice %30 {offsets = [0, 0], sizes = [1, 32], strides = [1, 1]} : vector<8x32xf32> to vector<1x32xf32>
    %32 = vector.extract_strided_slice %30 {offsets = [1, 0], sizes = [1, 32], strides = [1, 1]} : vector<8x32xf32> to vector<1x32xf32>
    %33 = vector.extract_strided_slice %30 {offsets = [2, 0], sizes = [1, 32], strides = [1, 1]} : vector<8x32xf32> to vector<1x32xf32>
    %34 = vector.extract_strided_slice %30 {offsets = [3, 0], sizes = [1, 32], strides = [1, 1]} : vector<8x32xf32> to vector<1x32xf32>
    %35 = vector.extract_strided_slice %30 {offsets = [4, 0], sizes = [1, 32], strides = [1, 1]} : vector<8x32xf32> to vector<1x32xf32>
    %36 = vector.extract_strided_slice %30 {offsets = [5, 0], sizes = [1, 32], strides = [1, 1]} : vector<8x32xf32> to vector<1x32xf32>
    %37 = vector.extract_strided_slice %30 {offsets = [6, 0], sizes = [1, 32], strides = [1, 1]} : vector<8x32xf32> to vector<1x32xf32>
    %38 = vector.extract_strided_slice %30 {offsets = [7, 0], sizes = [1, 1], strides = [1, 1]} : vector<8x32xf32> to vector<1x1xf32>
    %c0_16 = arith.constant 0 : index
    %c0_17 = arith.constant 0 : index
    %39 = vector.load %arg5[%c0_16, %c0_17] : memref<32x32xf32, #tpu.memory_space<vmem>>, vector<32x32xf32>
    %cst_18 = arith.constant dense<0.000000e+00> : vector<16x32xf32>
    %40 = tpu.matmul %29, %39, %cst_18 {dimension_numbers = #tpu.dot_dimension_numbers<[1], [0], [0], [1], [0, 0, 1, 1], [], []>} : vector<16x32xf32>, vector<32x32xf32>, vector<16x32xf32> -> vector<16x32xf32>
    %41 = vector.broadcast %31 : vector<1x32xf32> to vector<16x32xf32>
    %42 = arith.addf %40, %41 : vector<16x32xf32>
    %43 = arith.addf %2, %42 : vector<16x32xf32>
    %cst_19 = arith.constant dense<0.000000e+00> : vector<16xf32>
    %44 = vector.multi_reduction <add>, %43, %cst_19 [1] : vector<16x32xf32> to vector<16xf32>
    %45 = vector.shape_cast %44 : vector<16xf32> to vector<16x1xf32>
    %cst_20 = arith.constant 3.200000e+01 : f32
    %46 = vector.broadcast %cst_20 : f32 to vector<16x1xf32>
    %47 = arith.divf %45, %46 : vector<16x1xf32>
    %48 = vector.broadcast %47 : vector<16x1xf32> to vector<16x32xf32>
    %49 = arith.subf %43, %48 : vector<16x32xf32>
    %50 = arith.mulf %49, %49 : vector<16x32xf32>
    %cst_21 = arith.constant dense<0.000000e+00> : vector<16xf32>
    %51 = vector.multi_reduction <add>, %50, %cst_21 [1] : vector<16x32xf32> to vector<16xf32>
    %52 = vector.shape_cast %51 : vector<16xf32> to vector<16x1xf32>
    %cst_22 = arith.constant 3.200000e+01 : f32
    %53 = vector.broadcast %cst_22 : f32 to vector<16x1xf32>
    %54 = arith.divf %52, %53 : vector<16x1xf32>
    %cst_23 = arith.constant 9.99999974E-6 : f32
    %55 = vector.broadcast %cst_23 : f32 to vector<16x1xf32>
    %56 = arith.addf %54, %55 : vector<16x1xf32>
    %57 = math.rsqrt %56 : vector<16x1xf32>
    %58 = vector.broadcast %57 : vector<16x1xf32> to vector<16x32xf32>
    %59 = arith.mulf %49, %58 : vector<16x32xf32>
    %60 = vector.broadcast %32 : vector<1x32xf32> to vector<16x32xf32>
    %61 = arith.mulf %59, %60 : vector<16x32xf32>
    %62 = vector.broadcast %33 : vector<1x32xf32> to vector<16x32xf32>
    %63 = arith.addf %61, %62 : vector<16x32xf32>
    %c0_24 = arith.constant 0 : index
    %c0_25 = arith.constant 0 : index
    %64 = vector.load %arg6[%c0_24, %c0_25] : memref<32x64xf32, #tpu.memory_space<vmem>>, vector<32x64xf32>
    %cst_26 = arith.constant dense<0.000000e+00> : vector<16x64xf32>
    %65 = tpu.matmul %63, %64, %cst_26 {dimension_numbers = #tpu.dot_dimension_numbers<[1], [0], [0], [1], [0, 0, 1, 1], [], []>} : vector<16x32xf32>, vector<32x64xf32>, vector<16x64xf32> -> vector<16x64xf32>
    %c0_27 = arith.constant 0 : index
    %c0_28 = arith.constant 0 : index
    %66 = vector.load %arg7[%c0_27, %c0_28] : memref<1x64xf32, #tpu.memory_space<vmem>>, vector<1x64xf32>
    %67 = vector.broadcast %66 : vector<1x64xf32> to vector<16x64xf32>
    %68 = arith.addf %65, %67 : vector<16x64xf32>
    %cst_29 = arith.constant 0.000000e+00 : f32
    %69 = vector.broadcast %cst_29 : f32 to vector<16x64xf32>
    %70 = arith.maximumf %68, %69 : vector<16x64xf32>
    %c0_30 = arith.constant 0 : index
    %c0_31 = arith.constant 0 : index
    %71 = vector.load %arg8[%c0_30, %c0_31] : memref<64x32xf32, #tpu.memory_space<vmem>>, vector<64x32xf32>
    %cst_32 = arith.constant dense<0.000000e+00> : vector<16x32xf32>
    %72 = tpu.matmul %70, %71, %cst_32 {dimension_numbers = #tpu.dot_dimension_numbers<[1], [0], [0], [1], [0, 0, 1, 1], [], []>} : vector<16x64xf32>, vector<64x32xf32>, vector<16x32xf32> -> vector<16x32xf32>
    %73 = vector.broadcast %34 : vector<1x32xf32> to vector<16x32xf32>
    %74 = arith.addf %72, %73 : vector<16x32xf32>
    %75 = arith.addf %63, %74 : vector<16x32xf32>
    %cst_33 = arith.constant dense<0.000000e+00> : vector<16xf32>
    %76 = vector.multi_reduction <add>, %75, %cst_33 [1] : vector<16x32xf32> to vector<16xf32>
    %77 = vector.shape_cast %76 : vector<16xf32> to vector<16x1xf32>
    %cst_34 = arith.constant 3.200000e+01 : f32
    %78 = vector.broadcast %cst_34 : f32 to vector<16x1xf32>
    %79 = arith.divf %77, %78 : vector<16x1xf32>
    %80 = vector.broadcast %79 : vector<16x1xf32> to vector<16x32xf32>
    %81 = arith.subf %75, %80 : vector<16x32xf32>
    %82 = arith.mulf %81, %81 : vector<16x32xf32>
    %cst_35 = arith.constant dense<0.000000e+00> : vector<16xf32>
    %83 = vector.multi_reduction <add>, %82, %cst_35 [1] : vector<16x32xf32> to vector<16xf32>
    %84 = vector.shape_cast %83 : vector<16xf32> to vector<16x1xf32>
    %cst_36 = arith.constant 3.200000e+01 : f32
    %85 = vector.broadcast %cst_36 : f32 to vector<16x1xf32>
    %86 = arith.divf %84, %85 : vector<16x1xf32>
    %cst_37 = arith.constant 9.99999974E-6 : f32
    %87 = vector.broadcast %cst_37 : f32 to vector<16x1xf32>
    %88 = arith.addf %86, %87 : vector<16x1xf32>
    %89 = math.rsqrt %88 : vector<16x1xf32>
    %90 = vector.broadcast %89 : vector<16x1xf32> to vector<16x32xf32>
    %91 = arith.mulf %81, %90 : vector<16x32xf32>
    %92 = vector.broadcast %35 : vector<1x32xf32> to vector<16x32xf32>
    %93 = arith.mulf %91, %92 : vector<16x32xf32>
    %94 = vector.broadcast %36 : vector<1x32xf32> to vector<16x32xf32>
    %95 = arith.addf %93, %94 : vector<16x32xf32>
    %96 = vector.broadcast %37 : vector<1x32xf32> to vector<16x32xf32>
    %97 = arith.mulf %95, %96 : vector<16x32xf32>
    %cst_38 = arith.constant dense<0.000000e+00> : vector<16xf32>
    %98 = vector.multi_reduction <add>, %97, %cst_38 [1] : vector<16x32xf32> to vector<16xf32>
    %99 = vector.shape_cast %98 : vector<16xf32> to vector<16x1xf32>
    %100 = vector.broadcast %38 : vector<1x1xf32> to vector<16x1xf32>
    %101 = arith.addf %99, %100 : vector<16x1xf32>
    %102 = tpu.transpose %101, [1, 0] : vector<16x1xf32> -> vector<1x16xf32>
    %103 = vector.shape_cast %102 : vector<1x16xf32> to vector<1x1x16xf32>
    %c0_39 = arith.constant 0 : index
    %c0_40 = arith.constant 0 : index
    %c0_41 = arith.constant 0 : index
    %104 = vector.load %arg10[%c0_39, %c0_40, %c0_41] : memref<1x1x16xf32, #tpu.memory_space<vmem>>, vector<1x1x16xf32>
    tpu.vector_store %arg10[%c0_39, %c0_40, %c0_41], %103 {strides = array<i32>} : memref<1x1x16xf32, #tpu.memory_space<vmem>>, vector<1x1x16xf32>,
    return
  }
  func.func @transform_0(%arg0: i32) -> (i32, i32) {
    %c0_i32 = arith.constant 0 : i32
    %c0_i32_0 = arith.constant 0 : i32
    %c0_i32_1 = arith.constant 0 : i32
    return %c0_i32, %c0_i32_0 : i32, i32
  }
  func.func @transform_1(%arg0: i32) -> (i32, i32) {
    %c0_i32 = arith.constant 0 : i32
    %c0_i32_0 = arith.constant 0 : i32
    %c0_i32_1 = arith.constant 0 : i32
    return %c0_i32, %c0_i32_0 : i32, i32
  }
  func.func @transform_2(%arg0: i32) -> (i32, i32) {
    %c0_i32 = arith.constant 0 : i32
    %c0_i32_0 = arith.constant 0 : i32
    %c0_i32_1 = arith.constant 0 : i32
    return %c0_i32, %c0_i32_0 : i32, i32
  }
  func.func @transform_3(%arg0: i32) -> (i32, i32) {
    %c0_i32 = arith.constant 0 : i32
    %c0_i32_0 = arith.constant 0 : i32
    %c0_i32_1 = arith.constant 0 : i32
    return %c0_i32, %c0_i32_0 : i32, i32
  }
  func.func @transform_4(%arg0: i32) -> (i32, i32) {
    %c0_i32 = arith.constant 0 : i32
    %c0_i32_0 = arith.constant 0 : i32
    %c0_i32_1 = arith.constant 0 : i32
    return %c0_i32, %c0_i32_0 : i32, i32
  }
  func.func @transform_5(%arg0: i32) -> (i32, i32) {
    %c0_i32 = arith.constant 0 : i32
    %c0_i32_0 = arith.constant 0 : i32
    %c0_i32_1 = arith.constant 0 : i32
    return %c0_i32, %c0_i32_0 : i32, i32
  }
  func.func @transform_6(%arg0: i32) -> (i32, i32) {
    %c0_i32 = arith.constant 0 : i32
    %c0_i32_0 = arith.constant 0 : i32
    %c0_i32_1 = arith.constant 0 : i32
    return %c0_i32, %c0_i32_0 : i32, i32
  }
  func.func @transform_7(%arg0: i32) -> (i32, i32) {
    %c0_i32 = arith.constant 0 : i32
    %c0_i32_0 = arith.constant 0 : i32
    %c0_i32_1 = arith.constant 0 : i32
    return %c0_i32, %c0_i32_0 : i32, i32
  }
  func.func @transform_8(%arg0: i32) -> (i32, i32) {
    %c0_i32 = arith.constant 0 : i32
    %c0_i32_0 = arith.constant 0 : i32
    %c0_i32_1 = arith.constant 0 : i32
    return %c0_i32, %c0_i32_0 : i32, i32
  }
  func.func @transform_9(%arg0: i32) -> (i32, i32, i32) {
    %c0_i32 = arith.constant 0 : i32
    %c0_i32_0 = arith.constant 0 : i32
    %c0_i32_1 = arith.constant 0 : i32
    return %arg0, %c0_i32, %c0_i32_0 : i32, i32, i32
  }
}

</mosaic_0001>

<llo_original>
// kernel: tpu_custom_call.1
$region0: #{tpu_custom_call.1}
  #allocation0 [shape = 'u32[]', space=smem, size = 0x4, offset = 0x4, fixed_abs, tag = 'smem constant byte address 0x4 - core index']
  #allocation1 [shape = 'u32[144,128]{1,0:T(1,128)}', space=vmem, size = 0x12000, scoped, tag = 'internal scratch']
  %s0 = inlined_call_operand.vmem [shape: f32[16,64], index: 0, kind: input, shape index: {}]
  %s1 = inlined_call_operand.vmem [shape: f32[64,32], index: 1, kind: input, shape index: {}]
  %s2 = inlined_call_operand.vmem [shape: f32[32,96], index: 2, kind: input, shape index: {}]
  %s3 = inlined_call_operand.vmem [shape: f32[1,96], index: 3, kind: input, shape index: {}]
  %s4 = inlined_call_operand.vmem [shape: f32[32,32], index: 4, kind: input, shape index: {}]
  %s5 = inlined_call_operand.vmem [shape: f32[32,64], index: 5, kind: input, shape index: {}]
  %s6 = inlined_call_operand.vmem [shape: f32[1,64], index: 6, kind: input, shape index: {}]
  %s7 = inlined_call_operand.vmem [shape: f32[64,32], index: 7, kind: input, shape index: {}]
  %s8 = inlined_call_operand.vmem [shape: f32[8,32], index: 8, kind: input, shape index: {}]
  %s9 = inlined_call_operand.hbm [shape: f32[1,1,16], index: 9, kind: output, shape index: {}]
  %s10 = sld [smem:[#allocation0]]
  $region46: #{tpu_custom_call.1} parent=0
    _
  %s12 = ssub.s32 1, %s10
  %s13 = scalar_select 0, %s12, %s10
  $region1: #{tpu_custom_call.1} parent=0
    #allocation2 [shape = 'u8[512]{0}', space=vmem, size = 0x400, scoped, tag = 'output window, operand 0, single buffered']
    #allocation3 [shape = 's32[1]{0}', space=sflag, size = 0x4, scoped, tag = 'scoped memory for tpu_custom_call.1']
    %14 = vsyncpa [#allocation3], 0
    // Predicated region
    $region2: #{tpu_custom_call.1} parent=1 // pred_check
      _
    $region3: #{tpu_custom_call.1} parent=1 // pred_check_branch
      %16 = sbr.rel (0) target = $region5
    $region4: #{tpu_custom_call.1} parent=1 // pred_region
      _
    $region5: #{tpu_custom_call.1} parent=1 // pred_fallthru
      _
    // Predicated region
    $region6: #{tpu_custom_call.1} parent=1 // pred_check
      _
    $region7: #{tpu_custom_call.1} parent=1 // pred_check_branch
      %18 = sbr.rel (0) target = $region9
    $region8: #{tpu_custom_call.1} parent=1 // pred_region
      _
    $region9: #{tpu_custom_call.1} parent=1 // pred_fallthru
      _
    // Predicated region
    $region10: #{tpu_custom_call.1} parent=1 // pred_check
      _
    $region11: #{tpu_custom_call.1} parent=1 // pred_check_branch
      %20 = sbr.rel (0) target = $region13
    $region12: #{tpu_custom_call.1} parent=1 // pred_region
      _
    $region13: #{tpu_custom_call.1} parent=1 // pred_fallthru
      _
    // Predicated region
    $region14: #{tpu_custom_call.1} parent=1 // pred_check
      _
    $region15: #{tpu_custom_call.1} parent=1 // pred_check_branch
      %22 = sbr.rel (0) target = $region17
    $region16: #{tpu_custom_call.1} parent=1 // pred_region
      _
    $region17: #{tpu_custom_call.1} parent=1 // pred_fallthru
      _
    // Predicated region
    $region18: #{tpu_custom_call.1} parent=1 // pred_check
      _
    $region19: #{tpu_custom_call.1} parent=1 // pred_check_branch
      %24 = sbr.rel (0) target = $region21
    $region20: #{tpu_custom_call.1} parent=1 // pred_region
      _
    $region21: #{tpu_custom_call.1} parent=1 // pred_fallthru
      _
    // Predicated region
    $region22: #{tpu_custom_call.1} parent=1 // pred_check
      _
    $region23: #{tpu_custom_call.1} parent=1 // pred_check_branch
      %26 = sbr.rel (0) target = $region25
    $region24: #{tpu_custom_call.1} parent=1 // pred_region
      _
    $region25: #{tpu_custom_call.1} parent=1 // pred_fallthru
      _
    // Predicated region
    $region26: #{tpu_custom_call.1} parent=1 // pred_check
      _
    $region27: #{tpu_custom_call.1} parent=1 // pred_check_branch
      %28 = sbr.rel (0) target = $region29
    $region28: #{tpu_custom_call.1} parent=1 // pred_region
      _
    $region29: #{tpu_custom_call.1} parent=1 // pred_fallthru
      _
    // Predicated region
    $region30: #{tpu_custom_call.1} parent=1 // pred_check
      _
    $region31: #{tpu_custom_call.1} parent=1 // pred_check_branch
      %30 = sbr.rel (0) target = $region33
    $region32: #{tpu_custom_call.1} parent=1 // pred_region
      _
    $region33: #{tpu_custom_call.1} parent=1 // pred_fallthru
      _
    // Predicated region
    $region34: #{tpu_custom_call.1} parent=1 // pred_check
      _
    $region35: #{tpu_custom_call.1} parent=1 // pred_check_branch
      %32 = sbr.rel (0) target = $region37
    $region36: #{tpu_custom_call.1} parent=1 // pred_region
      _
    $region37: #{tpu_custom_call.1} parent=1 // pred_fallthru
      _
    %v33 = vld [vmem:[%s1] sm:$0xff]
    %v34 = vld [vmem:[%s1 + $0x8] sm:$0xff]
    %v35 = vld [vmem:[%s1 + $0x10] sm:$0xff]
    %v36 = vld [vmem:[%s1 + $0x18] sm:$0xff]
    %v37 = vld [vmem:[%s1 + $0x20] sm:$0xff]
    %v38 = vld [vmem:[%s1 + $0x28] sm:$0xff]
    %v39 = vld [vmem:[%s1 + $0x30] sm:$0xff]
    %v40 = vld [vmem:[%s1 + $0x38] sm:$0xff]
    %v41 = vld [vmem:[%s0] sm:$0xff]
    %v42 = vld [vmem:[%s0 + $0x8] sm:$0xff]
    %vm43 = vcmask 523264
    %v45 = vsel %vm43, %v41, 0
    %v48 = vsel %vm43, %v42, 0
    %50 = vmatprep.subr.mxu0 0.0
    %51 = vmatpush1.msra.mxu0 %v33
    %52 = vmatprep.subr.mxu0 0.0
    %53 = vmatpush1.msra.mxu0 %v34
    %54 = vmatprep.subr.mxu0 0.0
    %55 = vmatpush1.msra.mxu0 %v35
    %56 = vmatprep.subr.mxu0 0.0
    %57 = vmatpush1.msra.mxu0 %v36
    %58 = vmatprep.subr.mxu0 0.0
    %59 = vmatpush1.msra.mxu0 %v37
    %60 = vmatprep.subr.mxu0 0.0
    %61 = vmatpush1.msra.mxu0 %v38
    %62 = vmatprep.subr.mxu0 0.0
    %63 = vmatpush1.msra.mxu0 %v39
    %64 = vmatprep.subr.mxu0 0.0
    %65 = vmatpush1.msra.mxu0 %v40
    %66 = vmatprep.subr.mxu0 0.0
    %67 = vmatpush1.msra.mxu0 0.0
    %68 = vmatprep.subr.mxu0 0.0
    %69 = vmatpush1.msra.mxu0 0.0
    %70 = vmatprep.subr.mxu0 0.0
    %71 = vmatpush1.msra.mxu0 0.0
    %72 = vmatprep.subr.mxu0 0.0
    %73 = vmatpush1.msra.mxu0 0.0
    %74 = vmatprep.subr.mxu0 0.0
    %75 = vmatpush1.msra.mxu0 0.0
    %76 = vmatprep.subr.mxu0 0.0
    %77 = vmatpush1.msra.mxu0 0.0
    %78 = vmatprep.subr.mxu0 0.0
    %79 = vmatpush1.msra.mxu0 0.0
    %80 = vmatprep.subr.mxu0 0.0
    %81 = vmatpush1.msra.mxu0 0.0
    %82 = vmatprep.subr.mxu0 0.0
    %83 = vmatpush1.msra.mxu0 0.0
    %84 = vmatprep.subr.mxu0 0.0
    %85 = vmatpush1.msra.mxu0 0.0
    %86 = vmatprep.subr.mxu0 0.0
    %87 = vmatpush1.msra.mxu0 0.0
    %88 = vmatprep.subr.mxu0 0.0
    %89 = vmatpush1.msra.mxu0 0.0
    %90 = vmatprep.subr.mxu0 0.0
    %91 = vmatpush1.msra.mxu0 0.0
    %92 = vmatprep.subr.mxu0 0.0
    %93 = vmatpush1.msra.mxu0 0.0
    %94 = vmatprep.subr.mxu0 0.0
    %95 = vmatpush1.msra.mxu0 0.0
    %96 = vmatprep.subr.mxu0 0.0
    %97 = vmatpush1.msra.mxu0 0.0
    %98 = vmatprep.subr.mxu0 0.0
    %99 = vmatpush1.msra.mxu0 0.0
    %100 = vmatprep.subr.mxu0 0.0
    %101 = vmatpush1.msra.mxu0 0.0
    %102 = vmatprep.subr.mxu0 0.0
    %103 = vmatpush1.msra.mxu0 0.0
    %104 = vmatprep.subr.mxu0 0.0
    %105 = vmatpush1.msra.mxu0 0.0
    %106 = vmatprep.subr.mxu0 0.0
    %107 = vmatpush1.msra.mxu0 0.0
    %108 = vmatprep.subr.mxu0 0.0
    %109 = vmatpush1.msra.mxu0 0.0
    %110 = vmatprep.subr.mxu0 0.0
    %111 = vmatpush1.msra.mxu0 0.0
    %112 = vmatprep.subr.mxu0 0.0
    %113 = vmatpush1.msra.mxu0 0.0
    %114 = vmatprep.mubr.f32.mxu0 0.0
    %115 = vmatmul.mubr.f32.gmra.mrb[0].mxu0 %v45
    %v116 = vpop.f32.mrb[0].mxu0
    %v117 = vadd.f32 0.0, %v116
    %v118 = vpop.f32.mrb[0].mxu0
    %119 = vmatprep.mubr.f32.mxu0 0.0
    %120 = vmatmul.mubr.f32.gmra.mrb[0].mxu0 %v48
    %v121 = vpop.f32.mrb[0].mxu0
    %v122 = vadd.f32 0.0, %v121
    %v123 = vpop.f32.mrb[0].mxu0
    %124 = vdwg.mxu0
    %v125 = vld [vmem:[%s2] sm:$0xff]
    %v126 = vld [vmem:[%s2 + $0x8] sm:$0xff]
    %v127 = vld [vmem:[%s2 + $0x10] sm:$0xff]
    %v128 = vld [vmem:[%s2 + $0x18] sm:$0xff]
    %v129 = vld [vmem:[%s3] sm:$0x1]
    %v131 = vlaneseq
    %v132 = vshrl.u32 %v131, 7
    %v133 = vsub.s32 0, %v132
    %v134 = vrot.slane %v129, %v133
    %vm136 = vcmask 261120
    %v138 = vsel %vm136, %v117, 0
    %v141 = vsel %vm136, %v122, 0
    %143 = vmatprep.subr.mxu0 0.0
    %144 = vmatpush1.msra.mxu0 %v125
    %145 = vmatprep.subr.mxu0 0.0
    %146 = vmatpush1.msra.mxu0 %v126
    %147 = vmatprep.subr.mxu0 0.0
    %148 = vmatpush1.msra.mxu0 %v127
    %149 = vmatprep.subr.mxu0 0.0
    %150 = vmatpush1.msra.mxu0 %v128
    %151 = vmatprep.subr.mxu0 0.0
    %152 = vmatpush1.msra.mxu0 0.0
    %153 = vmatprep.subr.mxu0 0.0
    %154 = vmatpush1.msra.mxu0 0.0
    %155 = vmatprep.subr.mxu0 0.0
    %156 = vmatpush1.msra.mxu0 0.0
    %157 = vmatprep.subr.mxu0 0.0
    %158 = vmatpush1.msra.mxu0 0.0
    %159 = vmatprep.subr.mxu0 0.0
    %160 = vmatpush1.msra.mxu0 0.0
    %161 = vmatprep.subr.mxu0 0.0
    %162 = vmatpush1.msra.mxu0 0.0
    %163 = vmatprep.subr.mxu0 0.0
    %164 = vmatpush1.msra.mxu0 0.0
    %165 = vmatprep.subr.mxu0 0.0
    %166 = vmatpush1.msra.mxu0 0.0
    %167 = vmatprep.subr.mxu0 0.0
    %168 = vmatpush1.msra.mxu0 0.0
    %169 = vmatprep.subr.mxu0 0.0
    %170 = vmatpush1.msra.mxu0 0.0
    %171 = vmatprep.subr.mxu0 0.0
    %172 = vmatpush1.msra.mxu0 0.0
    %173 = vmatprep.subr.mxu0 0.0
    %174 = vmatpush1.msra.mxu0 0.0
    %175 = vmatprep.subr.mxu0 0.0
    %176 = vmatpush1.msra.mxu0 0.0
    %177 = vmatprep.subr.mxu0 0.0
    %178 = vmatpush1.msra.mxu0 0.0
    %179 = vmatprep.subr.mxu0 0.0
    %180 = vmatpush1.msra.mxu0 0.0
    %181 = vmatprep.subr.mxu0 0.0
    %182 = vmatpush1.msra.mxu0 0.0
    %183 = vmatprep.subr.mxu0 0.0
    %184 = vmatpush1.msra.mxu0 0.0
    %185 = vmatprep.subr.mxu0 0.0
    %186 = vmatpush1.msra.mxu0 0.0
    %187 = vmatprep.subr.mxu0 0.0
    %188 = vmatpush1.msra.mxu0 0.0
    %189 = vmatprep.subr.mxu0 0.0
    %190 = vmatpush1.msra.mxu0 0.0
    %191 = vmatprep.subr.mxu0 0.0
    %192 = vmatpush1.msra.mxu0 0.0
    %193 = vmatprep.subr.mxu0 0.0
    %194 = vmatpush1.msra.mxu0 0.0
    %195 = vmatprep.subr.mxu0 0.0
    %196 = vmatpush1.msra.mxu0 0.0
    %197 = vmatprep.subr.mxu0 0.0
    %198 = vmatpush1.msra.mxu0 0.0
    %199 = vmatprep.subr.mxu0 0.0
    %200 = vmatpush1.msra.mxu0 0.0
    %201 = vmatprep.subr.mxu0 0.0
    %202 = vmatpush1.msra.mxu0 0.0
    %203 = vmatprep.subr.mxu0 0.0
    %204 = vmatpush1.msra.mxu0 0.0
    %205 = vmatprep.subr.mxu0 0.0
    %206 = vmatpush1.msra.mxu0 0.0
    %207 = vmatprep.mubr.f32.mxu0 0.0
    %208 = vmatmul.mubr.f32.gmra.mrb[0].mxu0 %v138
    %v209 = vpop.f32.mrb[0].mxu0
    %v210 = vadd.f32 %v134, %v209
    %v211 = vpop.f32.mrb[0].mxu0
    %212 = vmatprep.mubr.f32.mxu0 0.0
    %213 = vmatmul.mubr.f32.gmra.mrb[0].mxu0 %v141
    %v214 = vpop.f32.mrb[0].mxu0
    %v215 = vadd.f32 %v134, %v214
    %v216 = vpop.f32.mrb[0].mxu0
    %217 = vdwg.mxu0
    %220 = vrot.lane.b32.xlu0 %v210, 96
    %v221 = vpop.permute.xlu0 %220
    %222 = vrot.lane.b32.xlu0 %v215, 96
    %v223 = vpop.permute.xlu0 %222
    %v224 = vsel %vm136, %v210, 0
    %v226 = vsel %vm136, %v215, 0
    %v228 = vsel %vm136, %v221, 0
    %v230 = vsel %vm136, %v223, 0
    %232 = vmatprep.subr.mxu0 0.0
    %233 = vmatpush1.xpose.msra.mxu0 %v228
    %234 = vmatprep.subr.mxu0 0.0
    %235 = vmatpush1.xpose.msra.mxu0 %v230
    %236 = vmatprep.subr.mxu0 0.0
    %237 = vmatpush1.xpose.msra.mxu0 0.0
    %238 = vmatprep.subr.mxu0 0.0
    %239 = vmatpush1.xpose.msra.mxu0 0.0
    %240 = vmatprep.subr.mxu0 0.0
    %241 = vmatpush1.xpose.msra.mxu0 0.0
    %242 = vmatprep.subr.mxu0 0.0
    %243 = vmatpush1.xpose.msra.mxu0 0.0
    %244 = vmatprep.subr.mxu0 0.0
    %245 = vmatpush1.xpose.msra.mxu0 0.0
    %246 = vmatprep.subr.mxu0 0.0
    %247 = vmatpush1.xpose.msra.mxu0 0.0
    %248 = vmatprep.subr.mxu0 0.0
    %249 = vmatpush1.xpose.msra.mxu0 0.0
    %250 = vmatprep.subr.mxu0 0.0
    %251 = vmatpush1.xpose.msra.mxu0 0.0
    %252 = vmatprep.subr.mxu0 0.0
    %253 = vmatpush1.xpose.msra.mxu0 0.0
    %254 = vmatprep.subr.mxu0 0.0
    %255 = vmatpush1.xpose.msra.mxu0 0.0
    %256 = vmatprep.subr.mxu0 0.0
    %257 = vmatpush1.xpose.msra.mxu0 0.0
    %258 = vmatprep.subr.mxu0 0.0
    %259 = vmatpush1.xpose.msra.mxu0 0.0
    %260 = vmatprep.subr.mxu0 0.0
    %261 = vmatpush1.xpose.msra.mxu0 0.0
    %262 = vmatprep.subr.mxu0 0.0
    %263 = vmatpush1.xpose.msra.mxu0 0.0
    %264 = vmatprep.subr.mxu0 0.0
    %265 = vmatpush1.xpose.msra.mxu0 0.0
    %266 = vmatprep.subr.mxu0 0.0
    %267 = vmatpush1.xpose.msra.mxu0 0.0
    %268 = vmatprep.subr.mxu0 0.0
    %269 = vmatpush1.xpose.msra.mxu0 0.0
    %270 = vmatprep.subr.mxu0 0.0
    %271 = vmatpush1.xpose.msra.mxu0 0.0
    %272 = vmatprep.subr.mxu0 0.0
    %273 = vmatpush1.xpose.msra.mxu0 0.0
    %274 = vmatprep.subr.mxu0 0.0
    %275 = vmatpush1.xpose.msra.mxu0 0.0
    %276 = vmatprep.subr.mxu0 0.0
    %277 = vmatpush1.xpose.msra.mxu0 0.0
    %278 = vmatprep.subr.mxu0 0.0
    %279 = vmatpush1.xpose.msra.mxu0 0.0
    %280 = vmatprep.subr.mxu0 0.0
    %281 = vmatpush1.xpose.msra.mxu0 0.0
    %282 = vmatprep.subr.mxu0 0.0
    %283 = vmatpush1.xpose.msra.mxu0 0.0
    %284 = vmatprep.subr.mxu0 0.0
    %285 = vmatpush1.xpose.msra.mxu0 0.0
    %286 = vmatprep.subr.mxu0 0.0
    %287 = vmatpush1.xpose.msra.mxu0 0.0
    %288 = vmatprep.subr.mxu0 0.0
    %289 = vmatpush1.xpose.msra.mxu0 0.0
    %290 = vmatprep.subr.mxu0 0.0
    %291 = vmatpush1.xpose.msra.mxu0 0.0
    %292 = vmatprep.subr.mxu0 0.0
    %293 = vmatpush1.xpose.msra.mxu0 0.0
    %294 = vmatprep.subr.mxu0 0.0
    %295 = vmatpush1.xpose.msra.mxu0 0.0
    %296 = vmatprep.mubr.f32.mxu0 0.0
    %297 = vmatmul.mubr.f32.gmra.mrb[0].mxu0 %v224
    %v298 = vpop.f32.mrb[0].mxu0
    %v299 = vadd.f32 0.0, %v298
    %v300 = vpop.f32.mrb[0].mxu0
    %301 = vmatprep.mubr.f32.mxu0 0.0
    %302 = vmatmul.mubr.f32.gmra.mrb[0].mxu0 %v226
    %v303 = vpop.f32.mrb[0].mxu0
    %v304 = vadd.f32 0.0, %v303
    %v305 = vpop.f32.mrb[0].mxu0
    %306 = vdwg.mxu0
    %v307 = vmul.f32 %v299, 0.17677669
    %v308 = vmul.f32 %v304, 0.17677669
    %vm309 = vcmask 130048
    %v310 = vsel %vm309, %v307, -inf
    %311 = vmax.xlane.f32.xlu0 %v310
    %v312 = vpop.xlane.xlu0 %311
    %v313 = vsel %vm309, %v308, -inf
    %314 = vmax.xlane.f32.xlu0 %v313
    %v315 = vpop.xlane.xlu0 %314
    %v316 = vsub.f32 %v307, %v312
    %v317 = vsub.f32 %v308, %v315
    %v318 = vmul.f32 %v316, 1.442695
    %v319 = vpow.pop %v318
    %v320 = vmul.f32 %v317, 1.442695
    %v321 = vpow.pop %v320
    %v322 = vsel %vm309, %v319, 0.0
    %323 = vadd.xlane.f32.xlu0 %v322
    %v324 = vpop.xlane.xlu0 %323
    %v325 = vsel %vm309, %v321, 0.0
    %326 = vadd.xlane.f32.xlu0 %v325
    %v327 = vpop.xlane.xlu0 %326
    %v328 = vrcp.pop %v324
    %v329 = vrcp.pop %v327
    %v330 = vmul.f32 %v324, %v328
    %v331 = vmul.f32 %v327, %v329
    %v332 = vsub.f32 2.0, %v330
    %v333 = vsub.f32 2.0, %v331
    %v334 = vmul.f32 %v328, %v332
    %v335 = vmul.f32 %v329, %v333
    %v336 = vmul.f32 %v319, %v334
    %v337 = vmul.f32 %v321, %v335
    %338 = vrot.lane.b32.xlu0 %v210, 64
    %v339 = vpop.permute.xlu0 %338
    %340 = vrot.lane.b32.xlu0 %v215, 64
    %v341 = vpop.permute.xlu0 %340
    %v345 = vsel %vm309, %v336, 0
    %v348 = vsel %vm309, %v337, 0
    %350 = vmatprep.subr.mxu0 0.0
    %351 = vmatpush1.msra.mxu0 %v339
    %352 = vmatprep.subr.mxu0 0.0
    %353 = vmatpush1.msra.mxu0 %v341
    %354 = vmatprep.subr.mxu0 0.0
    %355 = vmatpush1.msra.mxu0 0.0
    %356 = vmatprep.subr.mxu0 0.0
    %357 = vmatpush1.msra.mxu0 0.0
    %358 = vmatprep.subr.mxu0 0.0
    %359 = vmatpush1.msra.mxu0 0.0
    %360 = vmatprep.subr.mxu0 0.0
    %361 = vmatpush1.msra.mxu0 0.0
    %362 = vmatprep.subr.mxu0 0.0
    %363 = vmatpush1.msra.mxu0 0.0
    %364 = vmatprep.subr.mxu0 0.0
    %365 = vmatpush1.msra.mxu0 0.0
    %366 = vmatprep.subr.mxu0 0.0
    %367 = vmatpush1.msra.mxu0 0.0
    %368 = vmatprep.subr.mxu0 0.0
    %369 = vmatpush1.msra.mxu0 0.0
    %370 = vmatprep.subr.mxu0 0.0
    %371 = vmatpush1.msra.mxu0 0.0
    %372 = vmatprep.subr.mxu0 0.0
    %373 = vmatpush1.msra.mxu0 0.0
    %374 = vmatprep.subr.mxu0 0.0
    %375 = vmatpush1.msra.mxu0 0.0
    %376 = vmatprep.subr.mxu0 0.0
    %377 = vmatpush1.msra.mxu0 0.0
    %378 = vmatprep.subr.mxu0 0.0
    %379 = vmatpush1.msra.mxu0 0.0
    %380 = vmatprep.subr.mxu0 0.0
    %381 = vmatpush1.msra.mxu0 0.0
    %382 = vmatprep.subr.mxu0 0.0
    %383 = vmatpush1.msra.mxu0 0.0
    %384 = vmatprep.subr.mxu0 0.0
    %385 = vmatpush1.msra.mxu0 0.0
    %386 = vmatprep.subr.mxu0 0.0
    %387 = vmatpush1.msra.mxu0 0.0
    %388 = vmatprep.subr.mxu0 0.0
    %389 = vmatpush1.msra.mxu0 0.0
    %390 = vmatprep.subr.mxu0 0.0
    %391 = vmatpush1.msra.mxu0 0.0
    %392 = vmatprep.subr.mxu0 0.0
    %393 = vmatpush1.msra.mxu0 0.0
    %394 = vmatprep.subr.mxu0 0.0
    %395 = vmatpush1.msra.mxu0 0.0
    %396 = vmatprep.subr.mxu0 0.0
    %397 = vmatpush1.msra.mxu0 0.0
    %398 = vmatprep.subr.mxu0 0.0
    %399 = vmatpush1.msra.mxu0 0.0
    %400 = vmatprep.subr.mxu0 0.0
    %401 = vmatpush1.msra.mxu0 0.0
    %402 = vmatprep.subr.mxu0 0.0
    %403 = vmatpush1.msra.mxu0 0.0
    %404 = vmatprep.subr.mxu0 0.0
    %405 = vmatpush1.msra.mxu0 0.0
    %406 = vmatprep.subr.mxu0 0.0
    %407 = vmatpush1.msra.mxu0 0.0
    %408 = vmatprep.subr.mxu0 0.0
    %409 = vmatpush1.msra.mxu0 0.0
    %410 = vmatprep.subr.mxu0 0.0
    %411 = vmatpush1.msra.mxu0 0.0
    %412 = vmatprep.subr.mxu0 0.0
    %413 = vmatpush1.msra.mxu0 0.0
    %414 = vmatprep.mubr.f32.mxu0 0.0
    %415 = vmatmul.mubr.f32.gmra.mrb[0].mxu0 %v345
    %v416 = vpop.f32.mrb[0].mxu0
    %v417 = vadd.f32 0.0, %v416
    %v418 = vpop.f32.mrb[0].mxu0
    %419 = vmatprep.mubr.f32.mxu0 0.0
    %420 = vmatmul.mubr.f32.gmra.mrb[0].mxu0 %v348
    %v421 = vpop.f32.mrb[0].mxu0
    %v422 = vadd.f32 0.0, %v421
    %v423 = vpop.f32.mrb[0].mxu0
    %424 = vdwg.mxu0
    %v425 = vld [vmem:[%s8] sm:$0xff]
    %v426 = vld [vmem:[%s4] sm:$0xff]
    %v427 = vld [vmem:[%s4 + $0x8] sm:$0xff]
    %v428 = vld [vmem:[%s4 + $0x10] sm:$0xff]
    %v429 = vld [vmem:[%s4 + $0x18] sm:$0xff]
    %v430 = vlaneseq
    %v431 = vshrl.u32 %v430, 7
    %v432 = vsub.s32 0, %v431
    %v433 = vrot.slane %v425, %v432
    %v435 = vsel %vm136, %v417, 0
    %v438 = vsel %vm136, %v422, 0
    %440 = vmatprep.subr.mxu0 0.0
    %441 = vmatpush1.msra.mxu0 %v426
    %442 = vmatprep.subr.mxu0 0.0
    %443 = vmatpush1.msra.mxu0 %v427
    %444 = vmatprep.subr.mxu0 0.0
    %445 = vmatpush1.msra.mxu0 %v428
    %446 = vmatprep.subr.mxu0 0.0
    %447 = vmatpush1.msra.mxu0 %v429
    %448 = vmatprep.subr.mxu0 0.0
    %449 = vmatpush1.msra.mxu0 0.0
    %450 = vmatprep.subr.mxu0 0.0
    %451 = vmatpush1.msra.mxu0 0.0
    %452 = vmatprep.subr.mxu0 0.0
    %453 = vmatpush1.msra.mxu0 0.0
    %454 = vmatprep.subr.mxu0 0.0
    %455 = vmatpush1.msra.mxu0 0.0
    %456 = vmatprep.subr.mxu0 0.0
    %457 = vmatpush1.msra.mxu0 0.0
    %458 = vmatprep.subr.mxu0 0.0
    %459 = vmatpush1.msra.mxu0 0.0
    %460 = vmatprep.subr.mxu0 0.0
    %461 = vmatpush1.msra.mxu0 0.0
    %462 = vmatprep.subr.mxu0 0.0
    %463 = vmatpush1.msra.mxu0 0.0
    %464 = vmatprep.subr.mxu0 0.0
    %465 = vmatpush1.msra.mxu0 0.0
    %466 = vmatprep.subr.mxu0 0.0
    %467 = vmatpush1.msra.mxu0 0.0
    %468 = vmatprep.subr.mxu0 0.0
    %469 = vmatpush1.msra.mxu0 0.0
    %470 = vmatprep.subr.mxu0 0.0
    %471 = vmatpush1.msra.mxu0 0.0
    %472 = vmatprep.subr.mxu0 0.0
    %473 = vmatpush1.msra.mxu0 0.0
    %474 = vmatprep.subr.mxu0 0.0
    %475 = vmatpush1.msra.mxu0 0.0
    %476 = vmatprep.subr.mxu0 0.0
    %477 = vmatpush1.msra.mxu0 0.0
    %478 = vmatprep.subr.mxu0 0.0
    %479 = vmatpush1.msra.mxu0 0.0
    %480 = vmatprep.subr.mxu0 0.0
    %481 = vmatpush1.msra.mxu0 0.0
    %482 = vmatprep.subr.mxu0 0.0
    %483 = vmatpush1.msra.mxu0 0.0
    %484 = vmatprep.subr.mxu0 0.0
    %485 = vmatpush1.msra.mxu0 0.0
    %486 = vmatprep.subr.mxu0 0.0
    %487 = vmatpush1.msra.mxu0 0.0
    %488 = vmatprep.subr.mxu0 0.0
    %489 = vmatpush1.msra.mxu0 0.0
    %490 = vmatprep.subr.mxu0 0.0
    %491 = vmatpush1.msra.mxu0 0.0
    %492 = vmatprep.subr.mxu0 0.0
    %493 = vmatpush1.msra.mxu0 0.0
    %494 = vmatprep.subr.mxu0 0.0
    %495 = vmatpush1.msra.mxu0 0.0
    %496 = vmatprep.subr.mxu0 0.0
    %497 = vmatpush1.msra.mxu0 0.0
    %498 = vmatprep.subr.mxu0 0.0
    %499 = vmatpush1.msra.mxu0 0.0
    %500 = vmatprep.subr.mxu0 0.0
    %501 = vmatpush1.msra.mxu0 0.0
    %502 = vmatprep.subr.mxu0 0.0
    %503 = vmatpush1.msra.mxu0 0.0
    %504 = vmatprep.mubr.f32.mxu0 0.0
    %505 = vmatmul.mubr.f32.gmra.mrb[0].mxu0 %v435
    %v506 = vpop.f32.mrb[0].mxu0
    %v507 = vadd.f32 %v433, %v506
    %v508 = vpop.f32.mrb[0].mxu0
    %509 = vmatprep.mubr.f32.mxu0 0.0
    %510 = vmatmul.mubr.f32.gmra.mrb[0].mxu0 %v438
    %v511 = vpop.f32.mrb[0].mxu0
    %v512 = vadd.f32 %v433, %v511
    %v513 = vpop.f32.mrb[0].mxu0
    %514 = vdwg.mxu0
    %v515 = vadd.f32 %v117, %v507
    %v516 = vadd.f32 %v122, %v512
    %v517 = vsel %vm136, %v515, 0.0
    %518 = vadd.xlane.f32.xlu0 %v517
    %v519 = vpop.xlane.xlu0 %518
    %v520 = vsel %vm136, %v516, 0.0
    %521 = vadd.xlane.f32.xlu0 %v520
    %v522 = vpop.xlane.xlu0 %521
    %v523 = vrcp.pop 32.0
    %v524 = vmul.f32 %v519, %v523
    %v525 = vmul.f32 %v522, %v523
    %v526 = vsub.f32 %v515, %v524
    %v527 = vsub.f32 %v516, %v525
    %v528 = vmul.f32 %v526, %v526
    %v529 = vmul.f32 %v527, %v527
    %v530 = vsel %vm136, %v528, 0.0
    %531 = vadd.xlane.f32.xlu0 %v530
    %v532 = vpop.xlane.xlu0 %531
    %v533 = vsel %vm136, %v529, 0.0
    %534 = vadd.xlane.f32.xlu0 %v533
    %v535 = vpop.xlane.xlu0 %534
    %v536 = vmul.f32 %v532, %v523
    %v537 = vmul.f32 %v535, %v523
    %v538 = vadd.f32 %v536, 1e-05
    %v539 = vadd.f32 %v537, 1e-05
    %v540 = vrsqrt.pop %v538
    %v541 = vrsqrt.pop %v539
    %v542 = vmul.f32 %v526, %v540
    %v543 = vmul.f32 %v527, %v541
    %v544 = vlaneseq
    %v545 = vshrl.u32 %v544, 7
    %v546 = vsub.s32 1, %v545
    %v547 = vrot.slane %v425, %v546
    %v548 = vmul.f32 %v542, %v547
    %v549 = vmul.f32 %v543, %v547
    %v550 = vlaneseq
    %v551 = vshrl.u32 %v550, 7
    %v552 = vsub.s32 2, %v551
    %v553 = vrot.slane %v425, %v552
    %v554 = vadd.f32 %v548, %v553
    %v555 = vadd.f32 %v549, %v553
    %v556 = vld [vmem:[%s5] sm:$0xff]
    %v557 = vld [vmem:[%s5 + $0x8] sm:$0xff]
    %v558 = vld [vmem:[%s5 + $0x10] sm:$0xff]
    %v559 = vld [vmem:[%s5 + $0x18] sm:$0xff]
    %v560 = vld [vmem:[%s6] sm:$0x1]
    %v562 = vlaneseq
    %v563 = vshrl.u32 %v562, 7
    %v564 = vsub.s32 0, %v563
    %v565 = vrot.slane %v560, %v564
    %v568 = vsel %vm136, %v554, 0
    %v571 = vsel %vm136, %v555, 0
    %573 = vmatprep.subr.mxu0 0.0
    %574 = vmatpush1.msra.mxu0 %v556
    %575 = vmatprep.subr.mxu0 0.0
    %576 = vmatpush1.msra.mxu0 %v557
    %577 = vmatprep.subr.mxu0 0.0
    %578 = vmatpush1.msra.mxu0 %v558
    %579 = vmatprep.subr.mxu0 0.0
    %580 = vmatpush1.msra.mxu0 %v559
    %581 = vmatprep.subr.mxu0 0.0
    %582 = vmatpush1.msra.mxu0 0.0
    %583 = vmatprep.subr.mxu0 0.0
    %584 = vmatpush1.msra.mxu0 0.0
    %585 = vmatprep.subr.mxu0 0.0
    %586 = vmatpush1.msra.mxu0 0.0
    %587 = vmatprep.subr.mxu0 0.0
    %588 = vmatpush1.msra.mxu0 0.0
    %589 = vmatprep.subr.mxu0 0.0
    %590 = vmatpush1.msra.mxu0 0.0
    %591 = vmatprep.subr.mxu0 0.0
    %592 = vmatpush1.msra.mxu0 0.0
    %593 = vmatprep.subr.mxu0 0.0
    %594 = vmatpush1.msra.mxu0 0.0
    %595 = vmatprep.subr.mxu0 0.0
    %596 = vmatpush1.msra.mxu0 0.0
    %597 = vmatprep.subr.mxu0 0.0
    %598 = vmatpush1.msra.mxu0 0.0
    %599 = vmatprep.subr.mxu0 0.0
    %600 = vmatpush1.msra.mxu0 0.0
    %601 = vmatprep.subr.mxu0 0.0
    %602 = vmatpush1.msra.mxu0 0.0
    %603 = vmatprep.subr.mxu0 0.0
    %604 = vmatpush1.msra.mxu0 0.0
    %605 = vmatprep.subr.mxu0 0.0
    %606 = vmatpush1.msra.mxu0 0.0
    %607 = vmatprep.subr.mxu0 0.0
    %608 = vmatpush1.msra.mxu0 0.0
    %609 = vmatprep.subr.mxu0 0.0
    %610 = vmatpush1.msra.mxu0 0.0
    %611 = vmatprep.subr.mxu0 0.0
    %612 = vmatpush1.msra.mxu0 0.0
    %613 = vmatprep.subr.mxu0 0.0
    %614 = vmatpush1.msra.mxu0 0.0
    %615 = vmatprep.subr.mxu0 0.0
    %616 = vmatpush1.msra.mxu0 0.0
    %617 = vmatprep.subr.mxu0 0.0
    %618 = vmatpush1.msra.mxu0 0.0
    %619 = vmatprep.subr.mxu0 0.0
    %620 = vmatpush1.msra.mxu0 0.0
    %621 = vmatprep.subr.mxu0 0.0
    %622 = vmatpush1.msra.mxu0 0.0
    %623 = vmatprep.subr.mxu0 0.0
    %624 = vmatpush1.msra.mxu0 0.0
    %625 = vmatprep.subr.mxu0 0.0
    %626 = vmatpush1.msra.mxu0 0.0
    %627 = vmatprep.subr.mxu0 0.0
    %628 = vmatpush1.msra.mxu0 0.0
    %629 = vmatprep.subr.mxu0 0.0
    %630 = vmatpush1.msra.mxu0 0.0
    %631 = vmatprep.subr.mxu0 0.0
    %632 = vmatpush1.msra.mxu0 0.0
    %633 = vmatprep.subr.mxu0 0.0
    %634 = vmatpush1.msra.mxu0 0.0
    %635 = vmatprep.subr.mxu0 0.0
    %636 = vmatpush1.msra.mxu0 0.0
    %637 = vmatprep.mubr.f32.mxu0 0.0
    %638 = vmatmul.mubr.f32.gmra.mrb[0].mxu0 %v568
    %v639 = vpop.f32.mrb[0].mxu0
    %v640 = vadd.f32 %v565, %v639
    %v641 = vpop.f32.mrb[0].mxu0
    %642 = vmatprep.mubr.f32.mxu0 0.0
    %643 = vmatmul.mubr.f32.gmra.mrb[0].mxu0 %v571
    %v644 = vpop.f32.mrb[0].mxu0
    %v645 = vadd.f32 %v565, %v644
    %v646 = vpop.f32.mrb[0].mxu0
    %647 = vdwg.mxu0
    %v648 = vmax.f32 %v640, 0.0
    %v649 = vmax.f32 %v645, 0.0
    %v650 = vld [vmem:[%s7] sm:$0xff]
    %v651 = vld [vmem:[%s7 + $0x8] sm:$0xff]
    %v652 = vld [vmem:[%s7 + $0x10] sm:$0xff]
    %v653 = vld [vmem:[%s7 + $0x18] sm:$0xff]
    %v654 = vld [vmem:[%s7 + $0x20] sm:$0xff]
    %v655 = vld [vmem:[%s7 + $0x28] sm:$0xff]
    %v656 = vld [vmem:[%s7 + $0x30] sm:$0xff]
    %v657 = vld [vmem:[%s7 + $0x38] sm:$0xff]
    %v658 = vlaneseq
    %v659 = vshrl.u32 %v658, 7
    %v660 = vsub.s32 3, %v659
    %v661 = vrot.slane %v425, %v660
    %v663 = vsel %vm43, %v648, 0
    %v666 = vsel %vm43, %v649, 0
    %668 = vmatprep.subr.mxu0 0.0
    %669 = vmatpush1.msra.mxu0 %v650
    %670 = vmatprep.subr.mxu0 0.0
    %671 = vmatpush1.msra.mxu0 %v651
    %672 = vmatprep.subr.mxu0 0.0
    %673 = vmatpush1.msra.mxu0 %v652
    %674 = vmatprep.subr.mxu0 0.0
    %675 = vmatpush1.msra.mxu0 %v653
    %676 = vmatprep.subr.mxu0 0.0
    %677 = vmatpush1.msra.mxu0 %v654
    %678 = vmatprep.subr.mxu0 0.0
    %679 = vmatpush1.msra.mxu0 %v655
    %680 = vmatprep.subr.mxu0 0.0
    %681 = vmatpush1.msra.mxu0 %v656
    %682 = vmatprep.subr.mxu0 0.0
    %683 = vmatpush1.msra.mxu0 %v657
    %684 = vmatprep.subr.mxu0 0.0
    %685 = vmatpush1.msra.mxu0 0.0
    %686 = vmatprep.subr.mxu0 0.0
    %687 = vmatpush1.msra.mxu0 0.0
    %688 = vmatprep.subr.mxu0 0.0
    %689 = vmatpush1.msra.mxu0 0.0
    %690 = vmatprep.subr.mxu0 0.0
    %691 = vmatpush1.msra.mxu0 0.0
    %692 = vmatprep.subr.mxu0 0.0
    %693 = vmatpush1.msra.mxu0 0.0
    %694 = vmatprep.subr.mxu0 0.0
    %695 = vmatpush1.msra.mxu0 0.0
    %696 = vmatprep.subr.mxu0 0.0
    %697 = vmatpush1.msra.mxu0 0.0
    %698 = vmatprep.subr.mxu0 0.0
    %699 = vmatpush1.msra.mxu0 0.0
    %700 = vmatprep.subr.mxu0 0.0
    %701 = vmatpush1.msra.mxu0 0.0
    %702 = vmatprep.subr.mxu0 0.0
    %703 = vmatpush1.msra.mxu0 0.0
    %704 = vmatprep.subr.mxu0 0.0
    %705 = vmatpush1.msra.mxu0 0.0
    %706 = vmatprep.subr.mxu0 0.0
    %707 = vmatpush1.msra.mxu0 0.0
    %708 = vmatprep.subr.mxu0 0.0
    %709 = vmatpush1.msra.mxu0 0.0
    %710 = vmatprep.subr.mxu0 0.0
    %711 = vmatpush1.msra.mxu0 0.0
    %712 = vmatprep.subr.mxu0 0.0
    %713 = vmatpush1.msra.mxu0 0.0
    %714 = vmatprep.subr.mxu0 0.0
    %715 = vmatpush1.msra.mxu0 0.0
    %716 = vmatprep.subr.mxu0 0.0
    %717 = vmatpush1.msra.mxu0 0.0
    %718 = vmatprep.subr.mxu0 0.0
    %719 = vmatpush1.msra.mxu0 0.0
    %720 = vmatprep.subr.mxu0 0.0
    %721 = vmatpush1.msra.mxu0 0.0
    %722 = vmatprep.subr.mxu0 0.0
    %723 = vmatpush1.msra.mxu0 0.0
    %724 = vmatprep.subr.mxu0 0.0
    %725 = vmatpush1.msra.mxu0 0.0
    %726 = vmatprep.subr.mxu0 0.0
    %727 = vmatpush1.msra.mxu0 0.0
    %728 = vmatprep.subr.mxu0 0.0
    %729 = vmatpush1.msra.mxu0 0.0
    %730 = vmatprep.subr.mxu0 0.0
    %731 = vmatpush1.msra.mxu0 0.0
    %732 = vmatprep.mubr.f32.mxu0 0.0
    %733 = vmatmul.mubr.f32.gmra.mrb[0].mxu0 %v663
    %v734 = vpop.f32.mrb[0].mxu0
    %v735 = vadd.f32 %v661, %v734
    %v736 = vpop.f32.mrb[0].mxu0
    %737 = vmatprep.mubr.f32.mxu0 0.0
    %738 = vmatmul.mubr.f32.gmra.mrb[0].mxu0 %v666
    %v739 = vpop.f32.mrb[0].mxu0
    %v740 = vadd.f32 %v661, %v739
    %v741 = vpop.f32.mrb[0].mxu0
    %742 = vdwg.mxu0
    %v743 = vadd.f32 %v554, %v735
    %v744 = vadd.f32 %v555, %v740
    %v745 = vsel %vm136, %v743, 0.0
    %746 = vadd.xlane.f32.xlu0 %v745
    %v747 = vpop.xlane.xlu0 %746
    %v748 = vsel %vm136, %v744, 0.0
    %749 = vadd.xlane.f32.xlu0 %v748
    %v750 = vpop.xlane.xlu0 %749
    %v751 = vmul.f32 %v747, %v523
    %v752 = vmul.f32 %v750, %v523
    %v753 = vsub.f32 %v743, %v751
    %v754 = vsub.f32 %v744, %v752
    %v755 = vmul.f32 %v753, %v753
    %v756 = vmul.f32 %v754, %v754
    %v757 = vsel %vm136, %v755, 0.0
    %758 = vadd.xlane.f32.xlu0 %v757
    %v759 = vpop.xlane.xlu0 %758
    %v760 = vsel %vm136, %v756, 0.0
    %761 = vadd.xlane.f32.xlu0 %v760
    %v762 = vpop.xlane.xlu0 %761
    %v763 = vmul.f32 %v759, %v523
    %v764 = vmul.f32 %v762, %v523
    %v765 = vadd.f32 %v763, 1e-05
    %v766 = vadd.f32 %v764, 1e-05
    %v767 = vrsqrt.pop %v765
    %v768 = vrsqrt.pop %v766
    %v769 = vmul.f32 %v753, %v767
    %v770 = vmul.f32 %v754, %v768
    %v771 = vlaneseq
    %v772 = vshrl.u32 %v771, 7
    %v773 = vsub.s32 4, %v772
    %v774 = vrot.slane %v425, %v773
    %v775 = vmul.f32 %v769, %v774
    %v776 = vmul.f32 %v770, %v774
    %v777 = vlaneseq
    %v778 = vshrl.u32 %v777, 7
    %v779 = vsub.s32 5, %v778
    %v780 = vrot.slane %v425, %v779
    %v781 = vadd.f32 %v775, %v780
    %v782 = vadd.f32 %v776, %v780
    %v783 = vlaneseq
    %v784 = vshrl.u32 %v783, 7
    %v785 = vsub.s32 6, %v784
    %v786 = vrot.slane %v425, %v785
    %v787 = vmul.f32 %v781, %v786
    %v788 = vmul.f32 %v782, %v786
    %v789 = vsel %vm136, %v787, 0.0
    %790 = vadd.xlane.f32.xlu0 %v789
    %v791 = vpop.xlane.xlu0 %790
    %v792 = vsel %vm136, %v788, 0.0
    %793 = vadd.xlane.f32.xlu0 %v792
    %v794 = vpop.xlane.xlu0 %793
    %v795 = vlaneseq
    %v796 = vshrl.u32 %v795, 7
    %v797 = vsub.s32 7, %v796
    %v798 = vrot.slane %v425, %v797
    %v799 = vadd.f32 %v791, %v798
    %v800 = vadd.f32 %v794, %v798
    %801 = vxpose.xlu0.b32.start [1/16] %v799, 128
    %802 = vxpose.xlu0.b32.cont [2/16] %v800, 128
    %803 = vxpose.xlu0.b32.cont [3/16] 0.0, 128
    %804 = vxpose.xlu0.b32.cont [4/16] 0.0, 128
    %805 = vxpose.xlu0.b32.cont [5/16] 0.0, 128
    %806 = vxpose.xlu0.b32.cont [6/16] 0.0, 128
    %807 = vxpose.xlu0.b32.cont [7/16] 0.0, 128
    %808 = vxpose.xlu0.b32.cont [8/16] 0.0, 128
    %809 = vxpose.xlu0.b32.cont [9/16] 0.0, 128
    %810 = vxpose.xlu0.b32.cont [10/16] 0.0, 128
    %811 = vxpose.xlu0.b32.cont [11/16] 0.0, 128
    %812 = vxpose.xlu0.b32.cont [12/16] 0.0, 128
    %813 = vxpose.xlu0.b32.cont [13/16] 0.0, 128
    %814 = vxpose.xlu0.b32.cont [14/16] 0.0, 128
    %815 = vxpose.xlu0.b32.cont [15/16] 0.0, 128
    %816 = vxpose.xlu0.b32.end [16/16] 0.0, 128
    %v817 = vpop.trf.xlu0
    %v818 = vpop.trf.xlu0
    %v819 = vpop.trf.xlu0
    %v820 = vpop.trf.xlu0
    %v821 = vpop.trf.xlu0
    %v822 = vpop.trf.xlu0
    %v823 = vpop.trf.xlu0
    %v824 = vpop.trf.xlu0
    %v825 = vpop.trf.xlu0
    %v826 = vpop.trf.xlu0
    %v827 = vpop.trf.xlu0
    %v828 = vpop.trf.xlu0
    %v829 = vpop.trf.xlu0
    %v830 = vpop.trf.xlu0
    %v831 = vpop.trf.xlu0
    %v832 = vpop.trf.xlu0
    %vm833 = vcmask 122880
    %834 = vst.msk [vmem:[#allocation2] sm:$0x1] %vm833, %v817
    // Predicated region
    $region38: #{tpu_custom_call.1} parent=1 // pred_check
      _
    $region39: #{tpu_custom_call.1} parent=1 // pred_check_branch
      %836 = sbr.rel (0) target = $region41
    $region40: #{tpu_custom_call.1} parent=1 // pred_region
      %s838 = ssub.s32 16, 16
      %839 = vsyncadd [#allocation3], %s838
      %s841 = sshll.u32 [#allocation2], 4
      %s842 = int_to_ptr.vmem [resolvable:$true] %s841
      %844 = dma.vmem_to_hbm [thread:$0]  %s842, 16, %s9, [#allocation3]
    $region41: #{tpu_custom_call.1} parent=1 // pred_fallthru
      _
    // Predicated region
    $region42: #{tpu_custom_call.1} parent=1 // pred_check
      _
    $region43: #{tpu_custom_call.1} parent=1 // pred_check_branch
      %846 = sbr.rel (0) target = $region45
    $region44: #{tpu_custom_call.1} parent=1 // pred_region
      %847 = dma.done [#allocation3], 16
    $region45: #{tpu_custom_call.1} parent=1 // pred_fallthru
      _
    %848 = vsyncpa [#allocation3], 1

</llo_original>
